<compile_context>
chip_gen: v7x
topology: tpu7x:2x2x1
jax: 0.10.0
libtpu: 0.0.40
codegen_flags: <defaults>
</compile_context>

<pallas_src>
import jax
import jax.numpy as jnp
from jax.experimental import pallas as pl
from jax.experimental.pallas import tpu as pltpu

EPS = 1e-6
VN_SLOPE = 0.2      # VNLeakyReLU negative_slope
SCA_SLOPE = 0.01    # nn.LeakyReLU() default negative_slope


# ----------------------------------------------------------------------------- kernel
def _frontier_kernel(s_ref, v_ref,
                     w1v_ref, w1v2_ref, w1sv_ref, w1ss_ref, wg1_ref, bg1_ref,
                     wd_ref, w2v_ref, w2sv_ref, w2ss_ref,
                     out_ref):
    f32 = jnp.float32
    s = s_ref[...]                                    # (in_sca, TM)

    def dot(w, x):
        # MXU matmul; inputs may be bf16 (dot_dtype), accumulation is always f32.
        return jnp.dot(w, x.astype(w.dtype), preferred_element_type=f32)

    # xyz planes stay separate end-to-end: three small dots per vector weight
    # instead of one matmul on a lane-concatenated (C, 3*TM) slab.  The MXU has
    # huge slack (contraction depth 8..32) while vst/vld is the binding slot, so
    # trading two extra matmul pushes per weight for ZERO lane concats is a win.
    v0, v1, v2 = v_ref[0], v_ref[1], v_ref[2]         # (in_vec, TM) each

    # ---- GVLinear #1 ----
    w1v = w1v_ref[...]
    vi0, vi1, vi2 = dot(w1v, v0), dot(w1v, v1), dot(w1v, v2)          # (dh1, TM)
    v_norm = jnp.sqrt(vi0 * vi0 + vi1 * vi1 + vi2 * vi2)              # (dh1, TM)
    out_s1 = dot(w1sv_ref[...], v_norm) + dot(w1ss_ref[...], s)       # (hid_sca, TM)
    w1v2 = w1v2_ref[...]
    ov0, ov1, ov2 = dot(w1v2, vi0), dot(w1v2, vi1), dot(w1v2, vi2)    # (hid_vec, TM)
    gate = jax.nn.sigmoid(dot(wg1_ref[...], out_s1) + bg1_ref[...])   # (hid_vec, TM)
    ov0, ov1, ov2 = ov0 * gate, ov1 * gate, ov2 * gate

    # ---- VNLeakyReLU on vector channels ----
    wd = wd_ref[...]
    d0, d1, d2 = dot(wd, ov0), dot(wd, ov1), dot(wd, ov2)             # (hid_vec, TM)
    dotp = ov0 * d0 + ov1 * d1 + ov2 * d2
    dns = d0 * d0 + d1 * d1 + d2 * d2 + EPS
    r = pl.reciprocal(dns, approx=True)               # EUP slot (free next to ld/st)
    r = r * (2.0 - dns * r)                           # one NR step -> f32 accurate
    # vec1 = x - (1-slope)*(1-mask)*(dot/dns)*d   (algebraically identical to reference)
    coef = jnp.where(dotp >= 0.0, 0.0, (1.0 - VN_SLOPE) * dotp * r)
    x0, x1, x2 = ov0 - coef * d0, ov1 - coef * d1, ov2 - coef * d2

    # ---- LeakyReLU on scalar channels ----
    sca1 = jnp.where(out_s1 >= 0.0, out_s1, SCA_SLOPE * out_s1)       # (hid_sca, TM)

    # ---- GVLinear #2 (only the scalar branch feeds `pred`) ----
    w2v = w2v_ref[...]
    a0, a1, a2 = dot(w2v, x0), dot(w2v, x1), dot(w2v, x2)             # (dh2, TM)
    v_norm2 = jnp.sqrt(a0 * a0 + a1 * a1 + a2 * a2)                   # (dh2, TM)
    out_ref[...] = dot(w2sv_ref[...], v_norm2) + dot(w2ss_ref[...], sca1)   # (1, TM)


# ----------------------------------------------------------------------------- wrapper
def _rup(a, b):
    return -(-a // b) * b


def _pick_row_tile(M, tm):
    """Lane-aligned row tile.  Use the full `tm` (default 2048) whenever there is
    enough work for >= 8 grid steps (>= 4 per TensorCore on a 2-TC v7x, keeping the
    pipeline and both cores busy); otherwise split the padded row count into ~8
    lane-aligned chunks, never below 128."""
    M128 = _rup(max(M, 1), 128)
    tm_req = max(128, _rup(tm, 128))
    if M128 <= tm_req:
        return M128                      # tiny problem: one step holds every row
    steps_target = 8
    tm_cap = max(128, _rup(-(-M128 // steps_target), 128))
    return min(tm_req, tm_cap)


def frontier_layer_vn(params, h_att, idx_ligands, tm=2048, dot_dtype=jnp.bfloat16):
    """Scalar frontier prediction, pred (M, 1).

    dot_dtype=bfloat16 (default) halves the gathered-input HBM traffic on every
    generation — s / v only ever feed the MXU (bf16-native even on v5e) and
    accumulation stays f32.  Pass dot_dtype=float32 when closer-to-f32 parity with
    the PyTorch reference is required.
    """
    s_all, v_all = h_att
    M = int(idx_ligands.shape[0])
    in_sca = int(s_all.shape[1])
    in_vec = int(v_all.shape[1])

    if M == 0:                                        # degenerate-grid guard
        return jnp.zeros((0, 1), jnp.float32)

    tm_eff = _pick_row_tile(M, tm)
    Mp = _rup(M, tm_eff)

    # Gather + layout change in the wrapper: pad the *indices*, gather directly in
    # dot_dtype, and emit the exact per-plane rows-on-lanes layout the kernel
    # consumes — no separate HBM pad pass, no in-kernel reshuffle.
    # Padded rows (>= M) re-gather row 0 and produce garbage; it is sliced off below,
    # so nothing inside the kernel may ever reduce across the row/lane axis.
    # TODO(synk): a fully in-kernel gather (scalar-prefetched idx + chunked DMA +
    # XLU transpose) would remove this staged HBM intermediate entirely, but a
    # per-row DMA (128-224 B rows) is descriptor-bound, so it is left as glue.
    idx_pad = jnp.concatenate([idx_ligands.astype(jnp.int32),
                               jnp.zeros((Mp - M,), jnp.int32)])
    s = jnp.take(s_all, idx_pad, axis=0).astype(dot_dtype).T                    # (in_sca, Mp)
    v = jnp.transpose(jnp.take(v_all, idx_pad, axis=0).astype(dot_dtype),
                      (2, 1, 0))                                                # (3, in_vec, Mp)

    dh1 = params['w1_vec'].shape[0]
    hid_sca = params['w1_sca'].shape[0]
    hid_vec = params['w1_vec2'].shape[0]
    dh2 = params['w2_vec'].shape[0]

    # weights in (out, in) form -> kernel does W @ X, no in-kernel transposes;
    # the concatenated-input scalar linears are split so the kernel never concats.
    w1v = params['w1_vec'].astype(dot_dtype)
    w1v2 = params['w1_vec2'].astype(dot_dtype)
    w1sv = params['w1_sca'][:, :dh1].astype(dot_dtype)
    w1ss = params['w1_sca'][:, dh1:].astype(dot_dtype)
    wg1 = params['wg1'].astype(dot_dtype)
    bg1 = params['bg1'].reshape(hid_vec, 1).astype(jnp.float32)
    wd = params['wd'].astype(dot_dtype)
    w2v = params['w2_vec'].astype(dot_dtype)
    w2sv = params['w2_sca'][:, :dh2].astype(dot_dtype)
    w2ss = params['w2_sca'][:, dh2:].astype(dot_dtype)

    # VMEM budget from actual buffer math (double-buffered input/output blocks +
    # live f32 intermediates + margin), so raising tm never trips the 16/32 MiB
    # scoped defaults while staying below the v7x 64 MiB physical VMEM.
    in_itm = jnp.dtype(dot_dtype).itemsize
    block_bytes = (in_sca + 3 * in_vec) * tm_eff * in_itm + tm_eff * 4
    inter_rows = 3 * (dh1 + 3 * hid_vec + dh2) + 3 * hid_sca + 16
    vmem_est = 2 * block_bytes + inter_rows * tm_eff * 4 + (1 << 20)
    vmem_limit = int(min(60 * 2**20, max(32 * 2**20, 2 * vmem_est)))

    def fixed(a):
        nd = a.ndim
        return pl.BlockSpec(a.shape, lambda i, _nd=nd: (0,) * _nd)

    grid = (Mp // tm_eff,)
    out = pl.pallas_call(
        _frontier_kernel,
        out_shape=jax.ShapeDtypeStruct((1, Mp), jnp.float32),
        grid_spec=pltpu.PrefetchScalarGridSpec(
            num_scalar_prefetch=0,
            grid=grid,
            in_specs=[
                pl.BlockSpec((in_sca, tm_eff), lambda i: (0, i)),
                pl.BlockSpec((3, in_vec, tm_eff), lambda i: (0, 0, i)),
                fixed(w1v), fixed(w1v2), fixed(w1sv), fixed(w1ss),
                fixed(wg1), fixed(bg1), fixed(wd),
                fixed(w2v), fixed(w2sv), fixed(w2ss),
            ],
            out_specs=pl.BlockSpec((1, tm_eff), lambda i: (0, i)),
        ),
        # "parallel" lets the row axis shard across TensorCores (v7x: 2 TCs).
        compiler_params=pltpu.CompilerParams(
            dimension_semantics=("parallel",),
            vmem_limit_bytes=vmem_limit),
    )(s, v, w1v, w1v2, w1sv, w1ss, wg1, bg1, wd, w2v, w2sv, w2ss)
    return out[0, :M].reshape(M, 1)


# ----------------------------------------------------------------------------- params
def init_params(key, in_sca, in_vec, hid_sca, hid_vec):
    dh1 = max(in_vec, hid_vec)          # GVLinear hidden vector dim (layer 1)
    dh2 = max(hid_vec, 1)               # GVLinear hidden vector dim (layer 2)
    ks = jax.random.split(key, 8)
    p = {
        # GVLinear(in_sca, in_vec, hid_sca, hid_vec)
        'w1_vec':  0.3 * jax.random.normal(ks[0], (dh1, in_vec), jnp.float32),
        'w1_vec2': 0.3 * jax.random.normal(ks[1], (hid_vec, dh1), jnp.float32),
        'w1_sca':  0.3 * jax.random.normal(ks[2], (hid_sca, dh1 + in_sca), jnp.float32),
        'wg1':     0.3 * jax.random.normal(ks[3], (hid_vec, hid_sca), jnp.float32),
        'bg1':     0.1 * jax.random.normal(ks[4], (hid_vec,), jnp.float32),
        # VNLeakyReLU(hid_vec)
        'wd':      0.3 * jax.random.normal(ks[5], (hid_vec, hid_vec), jnp.float32),
        # GVLinear(hid_sca, hid_vec, 1, 1) — only the branches reaching the scalar output
        'w2_vec':  0.3 * jax.random.normal(ks[6], (dh2, hid_vec), jnp.float32),
        'w2_sca':  0.3 * jax.random.normal(ks[7], (1, dh2 + hid_sca), jnp.float32),
        # TODO(synk): lin_vector2 / scalar_to_vector_gates of the final GVLinear are
        # omitted — they only affect the (discarded) vector output, never `pred`.
    }
    return p


# ----------------------------------------------------------------------------- pure-JAX reference
def ref_forward(params, h_att, idx_ligands):
    s = jnp.take(h_att[0], idx_ligands, axis=0).astype(jnp.float32)   # (M, in_sca)
    v = jnp.take(h_att[1], idx_ligands, axis=0).astype(jnp.float32)   # (M, in_vec, 3)

    def vnlin(v, w):                   # v (M, C_in, 3), w (C_out, C_in)
        return jnp.einsum('oc,mck->mok', w, v)

    vi = vnlin(v, params['w1_vec'])
    vnorm = jnp.linalg.norm(vi, axis=-1)
    out_s = jnp.concatenate([vnorm, s], -1) @ params['w1_sca'].T
    out_v = vnlin(vi, params['w1_vec2'])
    gate = jax.nn.sigmoid(out_s @ params['wg1'].T + params['bg1'])
    out_v = out_v * gate[..., None]
    d = vnlin(out_v, params['wd'])
    dot = jnp.sum(out_v * d, -1, keepdims=True)
    dns = jnp.sum(d * d, -1, keepdims=True)
    mask = (dot >= 0).astype(jnp.float32)
    vec1 = VN_SLOPE * out_v + (1 - VN_SLOPE) * (mask * out_v +
                                                (1 - mask) * (out_v - dot / (dns + EPS) * d))
    sca1 = jnp.where(out_s >= 0, out_s, SCA_SLOPE * out_s)
    vi2 = vnlin(vec1, params['w2_vec'])
    vnorm2 = jnp.linalg.norm(vi2, axis=-1)
    return jnp.concatenate([vnorm2, sca1], -1) @ params['w2_sca'].T


# ----------------------------------------------------------------------------- main
if __name__ == "__main__":
    key = jax.random.PRNGKey(0)
    k_s, k_v, k_p = jax.random.split(key, 3)

    N, in_sca, in_vec = 16, 32, 8
    hid_sca, hid_vec = 16, 8

    h_att = [jax.random.normal(k_s, (N, in_sca), jnp.float32),
             jax.random.normal(k_v, (N, in_vec, 3), jnp.float32)]
    idx_ligands = jnp.array([0, 2, 5, 7, 9, 11, 13, 15], dtype=jnp.int32)   # M = 8

    params = init_params(k_p, in_sca, in_vec, hid_sca, hid_vec)

    ref = ref_forward(params, h_att, idx_ligands)

    # Default bf16-input path (HBM-traffic optimization on all generations;
    # accumulation in f32) — tolerance accounts for bf16 weights + activations.
    pred = frontier_layer_vn(params, h_att, idx_ligands)
    pred = jax.block_until_ready(pred)
    assert pred.shape == (idx_ligands.shape[0], 1), pred.shape
    assert bool(jnp.all(jnp.isfinite(pred)))
    assert jnp.allclose(pred, ref, atol=1e-1, rtol=1e-1), (pred, ref)

    # f32-input path.  Tolerance is kept moderate because both the Pallas kernel
    # and the XLA reference may use reduced-precision MXU passes for f32 matmuls;
    # exact-f32 parity users should force highest matmul precision globally.
    pred_f32 = frontier_layer_vn(params, h_att, idx_ligands, dot_dtype=jnp.float32)
    pred_f32 = jax.block_until_ready(pred_f32)
    assert jnp.allclose(pred_f32, ref, atol=5e-2, rtol=5e-2), (pred_f32, ref)

    # M = 0 edge case guard.
    empty = frontier_layer_vn(params, h_att, jnp.zeros((0,), jnp.int32))
    assert empty.shape == (0, 1)

    print("KERNEL_OK")
</pallas_src>

<mosaic_0001>
module attributes {stable_mosaic.version = 11 : i64} {
  func.func @_frontier_kernel(%arg0: i32, %arg1: memref<32x128xbf16, #tpu.memory_space<vmem>>, %arg2: memref<3x8x128xbf16, #tpu.memory_space<vmem>>, %arg3: memref<8x8xbf16, #tpu.memory_space<vmem>>, %arg4: memref<8x8xbf16, #tpu.memory_space<vmem>>, %arg5: memref<16x8xbf16, #tpu.memory_space<vmem>>, %arg6: memref<16x32xbf16, #tpu.memory_space<vmem>>, %arg7: memref<8x16xbf16, #tpu.memory_space<vmem>>, %arg8: memref<8x1xf32, #tpu.memory_space<vmem>>, %arg9: memref<8x8xbf16, #tpu.memory_space<vmem>>, %arg10: memref<8x8xbf16, #tpu.memory_space<vmem>>, %arg11: memref<1x8xbf16, #tpu.memory_space<vmem>>, %arg12: memref<1x16xbf16, #tpu.memory_space<vmem>>, %arg13: memref<1x128xf32, #tpu.memory_space<vmem>>) attributes {dimension_semantics = [#tpu.dimension_semantics<parallel>], iteration_bounds = array<i64: 1>, scalar_prefetch = 0 : i64, scratch_operands = 0 : i64, tpu.core_type = #tpu.core_type<tc>, window_params = [{transform_indices = @transform_0, window_bounds = array<i64: 32, 128>}, {transform_indices = @transform_1, window_bounds = array<i64: 3, 8, 128>}, {pipeline_mode = #tpu.pipeline_mode<synchronous>, transform_indices = @transform_2, window_bounds = array<i64: 8, 8>}, {pipeline_mode = #tpu.pipeline_mode<synchronous>, transform_indices = @transform_3, window_bounds = array<i64: 8, 8>}, {pipeline_mode = #tpu.pipeline_mode<synchronous>, transform_indices = @transform_4, window_bounds = array<i64: 16, 8>}, {pipeline_mode = #tpu.pipeline_mode<synchronous>, transform_indices = @transform_5, window_bounds = array<i64: 16, 32>}, {pipeline_mode = #tpu.pipeline_mode<synchronous>, transform_indices = @transform_6, window_bounds = array<i64: 8, 16>}, {pipeline_mode = #tpu.pipeline_mode<synchronous>, transform_indices = @transform_7, window_bounds = array<i64: 8, 1>}, {pipeline_mode = #tpu.pipeline_mode<synchronous>, transform_indices = @transform_8, window_bounds = array<i64: 8, 8>}, {pipeline_mode = #tpu.pipeline_mode<synchronous>, transform_indices = @transform_9, window_bounds = array<i64: 8, 8>}, {pipeline_mode = #tpu.pipeline_mode<synchronous>, transform_indices = @transform_10, window_bounds = array<i64: 1, 8>}, {pipeline_mode = #tpu.pipeline_mode<synchronous>, transform_indices = @transform_11, window_bounds = array<i64: 1, 16>}, {transform_indices = @transform_12, window_bounds = array<i64: 1, 128>}]} {
    %c0 = arith.constant 0 : index
    %c0_0 = arith.constant 0 : index
    %0 = vector.load %arg1[%c0, %c0_0] : memref<32x128xbf16, #tpu.memory_space<vmem>>, vector<32x128xbf16>
    %c0_1 = arith.constant 0 : index
    %c0_2 = arith.constant 0 : index
    %c0_3 = arith.constant 0 : index
    %1 = vector.load %arg2[%c0_1, %c0_2, %c0_3] : memref<3x8x128xbf16, #tpu.memory_space<vmem>>, vector<1x8x128xbf16>
    %2 = vector.shape_cast %1 : vector<1x8x128xbf16> to vector<8x128xbf16>
    %c1 = arith.constant 1 : index
    %c0_4 = arith.constant 0 : index
    %c0_5 = arith.constant 0 : index
    %3 = vector.load %arg2[%c1, %c0_4, %c0_5] : memref<3x8x128xbf16, #tpu.memory_space<vmem>>, vector<1x8x128xbf16>
    %4 = vector.shape_cast %3 : vector<1x8x128xbf16> to vector<8x128xbf16>
    %c2 = arith.constant 2 : index
    %c0_6 = arith.constant 0 : index
    %c0_7 = arith.constant 0 : index
    %5 = vector.load %arg2[%c2, %c0_6, %c0_7] : memref<3x8x128xbf16, #tpu.memory_space<vmem>>, vector<1x8x128xbf16>
    %6 = vector.shape_cast %5 : vector<1x8x128xbf16> to vector<8x128xbf16>
    %c0_8 = arith.constant 0 : index
    %c0_9 = arith.constant 0 : index
    %7 = vector.load %arg3[%c0_8, %c0_9] : memref<8x8xbf16, #tpu.memory_space<vmem>>, vector<8x8xbf16>
    %cst = arith.constant dense<0.000000e+00> : vector<8x128xf32>
    %8 = tpu.matmul %7, %2, %cst {dimension_numbers = #tpu.dot_dimension_numbers<[1], [0], [0], [1], [0, 0, 1, 1], [], []>} : vector<8x8xbf16>, vector<8x128xbf16>, vector<8x128xf32> -> vector<8x128xf32>
    %cst_10 = arith.constant dense<0.000000e+00> : vector<8x128xf32>
    %9 = tpu.matmul %7, %4, %cst_10 {dimension_numbers = #tpu.dot_dimension_numbers<[1], [0], [0], [1], [0, 0, 1, 1], [], []>} : vector<8x8xbf16>, vector<8x128xbf16>, vector<8x128xf32> -> vector<8x128xf32>
    %cst_11 = arith.constant dense<0.000000e+00> : vector<8x128xf32>
    %10 = tpu.matmul %7, %6, %cst_11 {dimension_numbers = #tpu.dot_dimension_numbers<[1], [0], [0], [1], [0, 0, 1, 1], [], []>} : vector<8x8xbf16>, vector<8x128xbf16>, vector<8x128xf32> -> vector<8x128xf32>
    %11 = arith.mulf %8, %8 : vector<8x128xf32>
    %12 = arith.mulf %9, %9 : vector<8x128xf32>
    %13 = arith.addf %11, %12 : vector<8x128xf32>
    %14 = arith.mulf %10, %10 : vector<8x128xf32>
    %15 = arith.addf %13, %14 : vector<8x128xf32>
    %16 = math.sqrt %15 : vector<8x128xf32>
    %c0_12 = arith.constant 0 : index
    %c0_13 = arith.constant 0 : index
    %17 = vector.load %arg5[%c0_12, %c0_13] : memref<16x8xbf16, #tpu.memory_space<vmem>>, vector<16x8xbf16>
    %18 = arith.truncf %16 : vector<8x128xf32> to vector<8x128xbf16>
    %cst_14 = arith.constant dense<0.000000e+00> : vector<16x128xf32>
    %19 = tpu.matmul %17, %18, %cst_14 {dimension_numbers = #tpu.dot_dimension_numbers<[1], [0], [0], [1], [0, 0, 1, 1], [], []>} : vector<16x8xbf16>, vector<8x128xbf16>, vector<16x128xf32> -> vector<16x128xf32>
    %c0_15 = arith.constant 0 : index
    %c0_16 = arith.constant 0 : index
    %20 = vector.load %arg6[%c0_15, %c0_16] : memref<16x32xbf16, #tpu.memory_space<vmem>>, vector<16x32xbf16>
    %cst_17 = arith.constant dense<0.000000e+00> : vector<16x128xf32>
    %21 = tpu.matmul %20, %0, %cst_17 {dimension_numbers = #tpu.dot_dimension_numbers<[1], [0], [0], [1], [0, 0, 1, 1], [], []>} : vector<16x32xbf16>, vector<32x128xbf16>, vector<16x128xf32> -> vector<16x128xf32>
    %22 = arith.addf %19, %21 : vector<16x128xf32>
    %c0_18 = arith.constant 0 : index
    %c0_19 = arith.constant 0 : index
    %23 = vector.load %arg4[%c0_18, %c0_19] : memref<8x8xbf16, #tpu.memory_space<vmem>>, vector<8x8xbf16>
    %24 = arith.truncf %8 : vector<8x128xf32> to vector<8x128xbf16>
    %cst_20 = arith.constant dense<0.000000e+00> : vector<8x128xf32>
    %25 = tpu.matmul %23, %24, %cst_20 {dimension_numbers = #tpu.dot_dimension_numbers<[1], [0], [0], [1], [0, 0, 1, 1], [], []>} : vector<8x8xbf16>, vector<8x128xbf16>, vector<8x128xf32> -> vector<8x128xf32>
    %26 = arith.truncf %9 : vector<8x128xf32> to vector<8x128xbf16>
    %cst_21 = arith.constant dense<0.000000e+00> : vector<8x128xf32>
    %27 = tpu.matmul %23, %26, %cst_21 {dimension_numbers = #tpu.dot_dimension_numbers<[1], [0], [0], [1], [0, 0, 1, 1], [], []>} : vector<8x8xbf16>, vector<8x128xbf16>, vector<8x128xf32> -> vector<8x128xf32>
    %28 = arith.truncf %10 : vector<8x128xf32> to vector<8x128xbf16>
    %cst_22 = arith.constant dense<0.000000e+00> : vector<8x128xf32>
    %29 = tpu.matmul %23, %28, %cst_22 {dimension_numbers = #tpu.dot_dimension_numbers<[1], [0], [0], [1], [0, 0, 1, 1], [], []>} : vector<8x8xbf16>, vector<8x128xbf16>, vector<8x128xf32> -> vector<8x128xf32>
    %c0_23 = arith.constant 0 : index
    %c0_24 = arith.constant 0 : index
    %30 = vector.load %arg7[%c0_23, %c0_24] : memref<8x16xbf16, #tpu.memory_space<vmem>>, vector<8x16xbf16>
    %31 = arith.truncf %22 : vector<16x128xf32> to vector<16x128xbf16>
    %cst_25 = arith.constant dense<0.000000e+00> : vector<8x128xf32>
    %32 = tpu.matmul %30, %31, %cst_25 {dimension_numbers = #tpu.dot_dimension_numbers<[1], [0], [0], [1], [0, 0, 1, 1], [], []>} : vector<8x16xbf16>, vector<16x128xbf16>, vector<8x128xf32> -> vector<8x128xf32>
    %c0_26 = arith.constant 0 : index
    %c0_27 = arith.constant 0 : index
    %33 = vector.load %arg8[%c0_26, %c0_27] : memref<8x1xf32, #tpu.memory_space<vmem>>, vector<8x1xf32>
    %34 = vector.broadcast %33 : vector<8x1xf32> to vector<8x128xf32>
    %35 = arith.addf %32, %34 : vector<8x128xf32>
    %36 = arith.negf %35 : vector<8x128xf32>
    %37 = math.exp %36 : vector<8x128xf32>
    %cst_28 = arith.constant 1.000000e+00 : f32
    %38 = vector.broadcast %cst_28 : f32 to vector<8x128xf32>
    %39 = arith.addf %38, %37 : vector<8x128xf32>
    %40 = arith.divf %38, %39 : vector<8x128xf32>
    %41 = arith.mulf %25, %40 : vector<8x128xf32>
    %42 = arith.mulf %27, %40 : vector<8x128xf32>
    %43 = arith.mulf %29, %40 : vector<8x128xf32>
    %c0_29 = arith.constant 0 : index
    %c0_30 = arith.constant 0 : index
    %44 = vector.load %arg9[%c0_29, %c0_30] : memref<8x8xbf16, #tpu.memory_space<vmem>>, vector<8x8xbf16>
    %45 = arith.truncf %41 : vector<8x128xf32> to vector<8x128xbf16>
    %cst_31 = arith.constant dense<0.000000e+00> : vector<8x128xf32>
    %46 = tpu.matmul %44, %45, %cst_31 {dimension_numbers = #tpu.dot_dimension_numbers<[1], [0], [0], [1], [0, 0, 1, 1], [], []>} : vector<8x8xbf16>, vector<8x128xbf16>, vector<8x128xf32> -> vector<8x128xf32>
    %47 = arith.truncf %42 : vector<8x128xf32> to vector<8x128xbf16>
    %cst_32 = arith.constant dense<0.000000e+00> : vector<8x128xf32>
    %48 = tpu.matmul %44, %47, %cst_32 {dimension_numbers = #tpu.dot_dimension_numbers<[1], [0], [0], [1], [0, 0, 1, 1], [], []>} : vector<8x8xbf16>, vector<8x128xbf16>, vector<8x128xf32> -> vector<8x128xf32>
    %49 = arith.truncf %43 : vector<8x128xf32> to vector<8x128xbf16>
    %cst_33 = arith.constant dense<0.000000e+00> : vector<8x128xf32>
    %50 = tpu.matmul %44, %49, %cst_33 {dimension_numbers = #tpu.dot_dimension_numbers<[1], [0], [0], [1], [0, 0, 1, 1], [], []>} : vector<8x8xbf16>, vector<8x128xbf16>, vector<8x128xf32> -> vector<8x128xf32>
    %51 = arith.mulf %41, %46 : vector<8x128xf32>
    %52 = arith.mulf %42, %48 : vector<8x128xf32>
    %53 = arith.addf %51, %52 : vector<8x128xf32>
    %54 = arith.mulf %43, %50 : vector<8x128xf32>
    %55 = arith.addf %53, %54 : vector<8x128xf32>
    %56 = arith.mulf %46, %46 : vector<8x128xf32>
    %57 = arith.mulf %48, %48 : vector<8x128xf32>
    %58 = arith.addf %56, %57 : vector<8x128xf32>
    %59 = arith.mulf %50, %50 : vector<8x128xf32>
    %60 = arith.addf %58, %59 : vector<8x128xf32>
    %cst_34 = arith.constant 9.99999997E-7 : f32
    %61 = vector.broadcast %cst_34 : f32 to vector<8x128xf32>
    %62 = arith.addf %60, %61 : vector<8x128xf32>
    %63 = tpu.reciprocal %62 {approx = true} : vector<8x128xf32> -> vector<8x128xf32>
    %64 = arith.mulf %62, %63 : vector<8x128xf32>
    %cst_35 = arith.constant 2.000000e+00 : f32
    %65 = vector.broadcast %cst_35 : f32 to vector<8x128xf32>
    %66 = arith.subf %65, %64 : vector<8x128xf32>
    %67 = arith.mulf %63, %66 : vector<8x128xf32>
    %cst_36 = arith.constant 0.000000e+00 : f32
    %68 = vector.broadcast %cst_36 : f32 to vector<8x128xf32>
    %69 = arith.cmpf oge, %55, %68 : vector<8x128xf32>
    %cst_37 = arith.constant 8.000000e-01 : f32
    %70 = vector.broadcast %cst_37 : f32 to vector<8x128xf32>
    %71 = arith.mulf %70, %55 : vector<8x128xf32>
    %72 = arith.mulf %71, %67 : vector<8x128xf32>
    %cst_38 = arith.constant 0.000000e+00 : f32
    %73 = vector.broadcast %cst_38 : f32 to vector<8x128xf32>
    %74 = arith.select %69, %73, %72 : vector<8x128xi1>, vector<8x128xf32>
    %75 = arith.mulf %74, %46 : vector<8x128xf32>
    %76 = arith.subf %41, %75 : vector<8x128xf32>
    %77 = arith.mulf %74, %48 : vector<8x128xf32>
    %78 = arith.subf %42, %77 : vector<8x128xf32>
    %79 = arith.mulf %74, %50 : vector<8x128xf32>
    %80 = arith.subf %43, %79 : vector<8x128xf32>
    %cst_39 = arith.constant 0.000000e+00 : f32
    %81 = vector.broadcast %cst_39 : f32 to vector<16x128xf32>
    %82 = arith.cmpf oge, %22, %81 : vector<16x128xf32>
    %cst_40 = arith.constant 0.00999999977 : f32
    %83 = vector.broadcast %cst_40 : f32 to vector<16x128xf32>
    %84 = arith.mulf %83, %22 : vector<16x128xf32>
    %85 = arith.select %82, %22, %84 : vector<16x128xi1>, vector<16x128xf32>
    %c0_41 = arith.constant 0 : index
    %c0_42 = arith.constant 0 : index
    %86 = vector.load %arg10[%c0_41, %c0_42] : memref<8x8xbf16, #tpu.memory_space<vmem>>, vector<8x8xbf16>
    %87 = arith.truncf %76 : vector<8x128xf32> to vector<8x128xbf16>
    %cst_43 = arith.constant dense<0.000000e+00> : vector<8x128xf32>
    %88 = tpu.matmul %86, %87, %cst_43 {dimension_numbers = #tpu.dot_dimension_numbers<[1], [0], [0], [1], [0, 0, 1, 1], [], []>} : vector<8x8xbf16>, vector<8x128xbf16>, vector<8x128xf32> -> vector<8x128xf32>
    %89 = arith.truncf %78 : vector<8x128xf32> to vector<8x128xbf16>
    %cst_44 = arith.constant dense<0.000000e+00> : vector<8x128xf32>
    %90 = tpu.matmul %86, %89, %cst_44 {dimension_numbers = #tpu.dot_dimension_numbers<[1], [0], [0], [1], [0, 0, 1, 1], [], []>} : vector<8x8xbf16>, vector<8x128xbf16>, vector<8x128xf32> -> vector<8x128xf32>
    %91 = arith.truncf %80 : vector<8x128xf32> to vector<8x128xbf16>
    %cst_45 = arith.constant dense<0.000000e+00> : vector<8x128xf32>
    %92 = tpu.matmul %86, %91, %cst_45 {dimension_numbers = #tpu.dot_dimension_numbers<[1], [0], [0], [1], [0, 0, 1, 1], [], []>} : vector<8x8xbf16>, vector<8x128xbf16>, vector<8x128xf32> -> vector<8x128xf32>
    %93 = arith.mulf %88, %88 : vector<8x128xf32>
    %94 = arith.mulf %90, %90 : vector<8x128xf32>
    %95 = arith.addf %93, %94 : vector<8x128xf32>
    %96 = arith.mulf %92, %92 : vector<8x128xf32>
    %97 = arith.addf %95, %96 : vector<8x128xf32>
    %98 = math.sqrt %97 : vector<8x128xf32>
    %c0_46 = arith.constant 0 : index
    %c0_47 = arith.constant 0 : index
    %99 = vector.load %arg11[%c0_46, %c0_47] : memref<1x8xbf16, #tpu.memory_space<vmem>>, vector<1x8xbf16>
    %100 = arith.truncf %98 : vector<8x128xf32> to vector<8x128xbf16>
    %cst_48 = arith.constant dense<0.000000e+00> : vector<1x128xf32>
    %101 = tpu.matmul %99, %100, %cst_48 {dimension_numbers = #tpu.dot_dimension_numbers<[1], [0], [0], [1], [0, 0, 1, 1], [], []>} : vector<1x8xbf16>, vector<8x128xbf16>, vector<1x128xf32> -> vector<1x128xf32>
    %c0_49 = arith.constant 0 : index
    %c0_50 = arith.constant 0 : index
    %102 = vector.load %arg12[%c0_49, %c0_50] : memref<1x16xbf16, #tpu.memory_space<vmem>>, vector<1x16xbf16>
    %103 = arith.truncf %85 : vector<16x128xf32> to vector<16x128xbf16>
    %cst_51 = arith.constant dense<0.000000e+00> : vector<1x128xf32>
    %104 = tpu.matmul %102, %103, %cst_51 {dimension_numbers = #tpu.dot_dimension_numbers<[1], [0], [0], [1], [0, 0, 1, 1], [], []>} : vector<1x16xbf16>, vector<16x128xbf16>, vector<1x128xf32> -> vector<1x128xf32>
    %105 = arith.addf %101, %104 : vector<1x128xf32>
    %c0_52 = arith.constant 0 : index
    %c0_53 = arith.constant 0 : index
    %106 = vector.load %arg13[%c0_52, %c0_53] : memref<1x128xf32, #tpu.memory_space<vmem>>, vector<1x128xf32>
    tpu.vector_store %arg13[%c0_52, %c0_53], %105 {strides = array<i32>} : memref<1x128xf32, #tpu.memory_space<vmem>>, vector<1x128xf32>,
    return
  }
  func.func @transform_0(%arg0: i32) -> (i32, i32) {
    %c0_i32 = arith.constant 0 : i32
    %c0_i32_0 = arith.constant 0 : i32
    return %c0_i32, %arg0 : i32, i32
  }
  func.func @transform_1(%arg0: i32) -> (i32, i32, i32) {
    %c0_i32 = arith.constant 0 : i32
    %c0_i32_0 = arith.constant 0 : i32
    %c0_i32_1 = arith.constant 0 : i32
    return %c0_i32, %c0_i32_0, %arg0 : i32, i32, i32
  }
  func.func @transform_2(%arg0: i32) -> (i32, i32) {
    %c0_i32 = arith.constant 0 : i32
    %c0_i32_0 = arith.constant 0 : i32
    %c0_i32_1 = arith.constant 0 : i32
    return %c0_i32, %c0_i32_0 : i32, i32
  }
  func.func @transform_3(%arg0: i32) -> (i32, i32) {
    %c0_i32 = arith.constant 0 : i32
    %c0_i32_0 = arith.constant 0 : i32
    %c0_i32_1 = arith.constant 0 : i32
    return %c0_i32, %c0_i32_0 : i32, i32
  }
  func.func @transform_4(%arg0: i32) -> (i32, i32) {
    %c0_i32 = arith.constant 0 : i32
    %c0_i32_0 = arith.constant 0 : i32
    %c0_i32_1 = arith.constant 0 : i32
    return %c0_i32, %c0_i32_0 : i32, i32
  }
  func.func @transform_5(%arg0: i32) -> (i32, i32) {
    %c0_i32 = arith.constant 0 : i32
    %c0_i32_0 = arith.constant 0 : i32
    %c0_i32_1 = arith.constant 0 : i32
    return %c0_i32, %c0_i32_0 : i32, i32
  }
  func.func @transform_6(%arg0: i32) -> (i32, i32) {
    %c0_i32 = arith.constant 0 : i32
    %c0_i32_0 = arith.constant 0 : i32
    %c0_i32_1 = arith.constant 0 : i32
    return %c0_i32, %c0_i32_0 : i32, i32
  }
  func.func @transform_7(%arg0: i32) -> (i32, i32) {
    %c0_i32 = arith.constant 0 : i32
    %c0_i32_0 = arith.constant 0 : i32
    %c0_i32_1 = arith.constant 0 : i32
    return %c0_i32, %c0_i32_0 : i32, i32
  }
  func.func @transform_8(%arg0: i32) -> (i32, i32) {
    %c0_i32 = arith.constant 0 : i32
    %c0_i32_0 = arith.constant 0 : i32
    %c0_i32_1 = arith.constant 0 : i32
    return %c0_i32, %c0_i32_0 : i32, i32
  }
  func.func @transform_9(%arg0: i32) -> (i32, i32) {
    %c0_i32 = arith.constant 0 : i32
    %c0_i32_0 = arith.constant 0 : i32
    %c0_i32_1 = arith.constant 0 : i32
    return %c0_i32, %c0_i32_0 : i32, i32
  }
  func.func @transform_10(%arg0: i32) -> (i32, i32) {
    %c0_i32 = arith.constant 0 : i32
    %c0_i32_0 = arith.constant 0 : i32
    %c0_i32_1 = arith.constant 0 : i32
    return %c0_i32, %c0_i32_0 : i32, i32
  }
  func.func @transform_11(%arg0: i32) -> (i32, i32) {
    %c0_i32 = arith.constant 0 : i32
    %c0_i32_0 = arith.constant 0 : i32
    %c0_i32_1 = arith.constant 0 : i32
    return %c0_i32, %c0_i32_0 : i32, i32
  }
  func.func @transform_12(%arg0: i32) -> (i32, i32) {
    %c0_i32 = arith.constant 0 : i32
    %c0_i32_0 = arith.constant 0 : i32
    return %c0_i32, %arg0 : i32, i32
  }
}

</mosaic_0001>

<llo_original>
// kernel: tpu_custom_call.1
$region0: #{tpu_custom_call.1}
  #allocation0 [shape = 'u32[]', space=smem, size = 0x4, offset = 0x4, fixed_abs, tag = 'smem constant byte address 0x4 - core index']
  #allocation1 [shape = 'u32[144,128]{1,0:T(1,128)}', space=vmem, size = 0x12000, scoped, tag = 'internal scratch']
  %s0 = inlined_call_operand.vmem [shape: bf16[32,128], index: 0, kind: input, shape index: {}]
  %s1 = inlined_call_operand.hbm [shape: bf16[3,8,128], index: 1, kind: input, shape index: {}]
  %s2 = inlined_call_operand.hbm [shape: bf16[8,8], index: 2, kind: input, shape index: {}]
  %s3 = inlined_call_operand.vmem [shape: bf16[8,8], index: 3, kind: input, shape index: {}]
  %s4 = inlined_call_operand.vmem [shape: bf16[16,8], index: 4, kind: input, shape index: {}]
  %s5 = inlined_call_operand.vmem [shape: bf16[16,32], index: 5, kind: input, shape index: {}]
  %s6 = inlined_call_operand.vmem [shape: bf16[8,16], index: 6, kind: input, shape index: {}]
  %s7 = inlined_call_operand.vmem [shape: f32[8,1], index: 7, kind: input, shape index: {}]
  %s8 = inlined_call_operand.vmem [shape: bf16[8,8], index: 8, kind: input, shape index: {}]
  %s9 = inlined_call_operand.vmem [shape: bf16[8,8], index: 9, kind: input, shape index: {}]
  %s10 = inlined_call_operand.vmem [shape: bf16[1,8], index: 10, kind: input, shape index: {}]
  %s11 = inlined_call_operand.vmem [shape: bf16[1,16], index: 11, kind: input, shape index: {}]
  %s12 = inlined_call_operand.hbm [shape: f32[1,128], index: 12, kind: output, shape index: {}]
  %s13 = sld [smem:[#allocation0]]
  $region66: #{tpu_custom_call.1} parent=0
    _
  %s15 = ssub.s32 1, %s13
  %s16 = scalar_select 0, %s15, %s13
  $region1: #{tpu_custom_call.1} parent=0
    #allocation2 [shape = 'u8[6144]{0}', space=vmem, size = 0x1800, scoped, tag = 'input window, operand 1, single buffered']
    #allocation3 [shape = 's32[1]{0}', space=sflag, size = 0x4, scoped, tag = 'scoped memory for tpu_custom_call.1']
    #allocation4 [shape = 's32[1]{0}', space=sflag, size = 0x4, scoped, tag = 'scoped memory for tpu_custom_call.1']
    #allocation5 [shape = 'u8[2048]{0}', space=vmem, size = 0x800, scoped, tag = 'input window, operand 2, single buffered']
    #allocation6 [shape = 's32[1]{0}', space=sflag, size = 0x4, scoped, tag = 'scoped memory for tpu_custom_call.1']
    #allocation7 [shape = 'u8[512]{0}', space=vmem, size = 0x400, scoped, tag = 'output window, operand 0, single buffered']
    %17 = vsyncpa [#allocation3], 0
    %18 = vsyncpa [#allocation6], 0
    %19 = vsyncpa [#allocation4], 0
    // Predicated region
    $region2: #{tpu_custom_call.1} parent=1 // pred_check
      _
    $region3: #{tpu_custom_call.1} parent=1 // pred_check_branch
      %21 = sbr.rel (0) target = $region5
    $region4: #{tpu_custom_call.1} parent=1 // pred_region
      _
    $region5: #{tpu_custom_call.1} parent=1 // pred_fallthru
      _
    // Predicated region
    $region6: #{tpu_custom_call.1} parent=1 // pred_check
      _
    $region7: #{tpu_custom_call.1} parent=1 // pred_check_branch
      %23 = sbr.rel (0) target = $region9
    $region8: #{tpu_custom_call.1} parent=1 // pred_region
      %s25 = ssub.s32 192, 192
      %26 = vsyncadd [#allocation3], %s25
      %s27 = sshll.u32 [#allocation2], 4
      %s28 = int_to_ptr.vmem [resolvable:$true] %s27
      %33 = dma.hbm_to_vmem [thread:$0]  %s1, 192, %s28, [#allocation3], 64, 64, 4
    $region9: #{tpu_custom_call.1} parent=1 // pred_fallthru
      _
    // Predicated region
    $region10: #{tpu_custom_call.1} parent=1 // pred_check
      _
    $region11: #{tpu_custom_call.1} parent=1 // pred_check_branch
      %35 = sbr.rel (0) target = $region13
    $region12: #{tpu_custom_call.1} parent=1 // pred_region
      %s37 = ssub.s32 64, 64
      %38 = vsyncadd [#allocation6], %s37
      %s40 = sshll.u32 [#allocation5], 4
      %s41 = int_to_ptr.vmem [resolvable:$true] %s40
      %43 = dma.hbm_to_vmem [thread:$0]  %s2, 64, %s41, [#allocation6]
    $region13: #{tpu_custom_call.1} parent=1 // pred_fallthru
      _
    // Predicated region
    $region14: #{tpu_custom_call.1} parent=1 // pred_check
      _
    $region15: #{tpu_custom_call.1} parent=1 // pred_check_branch
      %45 = sbr.rel (0) target = $region17
    $region16: #{tpu_custom_call.1} parent=1 // pred_region
      _
    $region17: #{tpu_custom_call.1} parent=1 // pred_fallthru
      _
    // Predicated region
    $region18: #{tpu_custom_call.1} parent=1 // pred_check
      _
    $region19: #{tpu_custom_call.1} parent=1 // pred_check_branch
      %47 = sbr.rel (0) target = $region21
    $region20: #{tpu_custom_call.1} parent=1 // pred_region
      _
    $region21: #{tpu_custom_call.1} parent=1 // pred_fallthru
      _
    // Predicated region
    $region22: #{tpu_custom_call.1} parent=1 // pred_check
      _
    $region23: #{tpu_custom_call.1} parent=1 // pred_check_branch
      %49 = sbr.rel (0) target = $region25
    $region24: #{tpu_custom_call.1} parent=1 // pred_region
      _
    $region25: #{tpu_custom_call.1} parent=1 // pred_fallthru
      _
    // Predicated region
    $region26: #{tpu_custom_call.1} parent=1 // pred_check
      _
    $region27: #{tpu_custom_call.1} parent=1 // pred_check_branch
      %51 = sbr.rel (0) target = $region29
    $region28: #{tpu_custom_call.1} parent=1 // pred_region
      _
    $region29: #{tpu_custom_call.1} parent=1 // pred_fallthru
      _
    // Predicated region
    $region30: #{tpu_custom_call.1} parent=1 // pred_check
      _
    $region31: #{tpu_custom_call.1} parent=1 // pred_check_branch
      %53 = sbr.rel (0) target = $region33
    $region32: #{tpu_custom_call.1} parent=1 // pred_region
      _
    $region33: #{tpu_custom_call.1} parent=1 // pred_fallthru
      _
    // Predicated region
    $region34: #{tpu_custom_call.1} parent=1 // pred_check
      _
    $region35: #{tpu_custom_call.1} parent=1 // pred_check_branch
      %55 = sbr.rel (0) target = $region37
    $region36: #{tpu_custom_call.1} parent=1 // pred_region
      _
    $region37: #{tpu_custom_call.1} parent=1 // pred_fallthru
      _
    // Predicated region
    $region38: #{tpu_custom_call.1} parent=1 // pred_check
      _
    $region39: #{tpu_custom_call.1} parent=1 // pred_check_branch
      %57 = sbr.rel (0) target = $region41
    $region40: #{tpu_custom_call.1} parent=1 // pred_region
      _
    $region41: #{tpu_custom_call.1} parent=1 // pred_fallthru
      _
    // Predicated region
    $region42: #{tpu_custom_call.1} parent=1 // pred_check
      _
    $region43: #{tpu_custom_call.1} parent=1 // pred_check_branch
      %59 = sbr.rel (0) target = $region45
    $region44: #{tpu_custom_call.1} parent=1 // pred_region
      _
    $region45: #{tpu_custom_call.1} parent=1 // pred_fallthru
      _
    // Predicated region
    $region46: #{tpu_custom_call.1} parent=1 // pred_check
      _
    $region47: #{tpu_custom_call.1} parent=1 // pred_check_branch
      %61 = sbr.rel (0) target = $region49
    $region48: #{tpu_custom_call.1} parent=1 // pred_region
      _
    $region49: #{tpu_custom_call.1} parent=1 // pred_fallthru
      _
    // Predicated region
    $region50: #{tpu_custom_call.1} parent=1 // pred_check
      _
    $region51: #{tpu_custom_call.1} parent=1 // pred_check_branch
      %63 = sbr.rel (0) target = $region53
    $region52: #{tpu_custom_call.1} parent=1 // pred_region
      %64 = dma.done [#allocation3], 192
    $region53: #{tpu_custom_call.1} parent=1 // pred_fallthru
      _
    // Predicated region
    $region54: #{tpu_custom_call.1} parent=1 // pred_check
      _
    $region55: #{tpu_custom_call.1} parent=1 // pred_check_branch
      %66 = sbr.rel (0) target = $region57
    $region56: #{tpu_custom_call.1} parent=1 // pred_region
      %67 = dma.done [#allocation6], 64
    $region57: #{tpu_custom_call.1} parent=1 // pred_fallthru
      _
    %v69 = vld [vmem:[%s0] sm:$0xf]
    %v70 = vld [vmem:[%s0 + $0x4] sm:$0xf]
    %v71 = vld [vmem:[%s0 + $0x8] sm:$0xf]
    %v72 = vld [vmem:[%s0 + $0xc] sm:$0xf]
    %v73 = vld [vmem:[#allocation2] sm:$0xf]
    %s74 = scalar_lea.vmem [#allocation2], 4
    %v75 = vld [vmem:[%s74] sm:$0xf]
    %s76 = scalar_lea.vmem [#allocation2], 8
    %v77 = vld [vmem:[%s76] sm:$0xf]
    %v78 = vld [vmem:[#allocation5] sm:$0xf]
    %vm79 = vcmask 64512
    %v81 = vsel %vm79, %v78, 0
    %vm83 = vcmask 1043456
    %v85 = vsel %vm83, %v73, 0
    %87 = vmatprep.subr.bf16.mxu0 0
    %88 = vmatpush1.bf16.msra.mxu0 %v85
    %89 = vmatprep.subr.bf16.mxu0 0
    %90 = vmatpush1.bf16.msra.mxu0 0
    %91 = vmatprep.subr.bf16.mxu0 0
    %92 = vmatpush1.bf16.msra.mxu0 0
    %93 = vmatprep.subr.bf16.mxu0 0
    %94 = vmatpush1.bf16.msra.mxu0 0
    %95 = vmatprep.subr.bf16.mxu0 0
    %96 = vmatpush1.bf16.msra.mxu0 0
    %97 = vmatprep.subr.bf16.mxu0 0
    %98 = vmatpush1.bf16.msra.mxu0 0
    %99 = vmatprep.subr.bf16.mxu0 0
    %100 = vmatpush1.bf16.msra.mxu0 0
    %101 = vmatprep.subr.bf16.mxu0 0
    %102 = vmatpush1.bf16.msra.mxu0 0
    %103 = vmatprep.subr.bf16.mxu0 0
    %104 = vmatpush1.bf16.msra.mxu0 0
    %105 = vmatprep.subr.bf16.mxu0 0
    %106 = vmatpush1.bf16.msra.mxu0 0
    %107 = vmatprep.subr.bf16.mxu0 0
    %108 = vmatpush1.bf16.msra.mxu0 0
    %109 = vmatprep.subr.bf16.mxu0 0
    %110 = vmatpush1.bf16.msra.mxu0 0
    %111 = vmatprep.subr.bf16.mxu0 0
    %112 = vmatpush1.bf16.msra.mxu0 0
    %113 = vmatprep.subr.bf16.mxu0 0
    %114 = vmatpush1.bf16.msra.mxu0 0
    %115 = vmatprep.subr.bf16.mxu0 0
    %116 = vmatpush1.bf16.msra.mxu0 0
    %117 = vmatprep.subr.bf16.mxu0 0
    %118 = vmatpush1.bf16.msra.mxu0 0
    %119 = vmatprep.mubr.bf16.mxu0 0
    %120 = vmatmul.mubr.bf16.gmra.mrb[0].mxu0 %v81
    %v121 = vpop.f32.mrb[0].mxu0
    %v122 = vadd.f32 0.0, %v121
    %v123 = vpop.f32.mrb[0].mxu0
    %v124 = vpop.f32.mrb[0].mxu0
    %v125 = vpop.f32.mrb[0].mxu0
    %126 = vdwg.mxu0
    %v128 = vsel %vm83, %v75, 0
    %130 = vmatprep.subr.bf16.mxu0 0
    %131 = vmatpush1.bf16.msra.mxu0 %v128
    %132 = vmatprep.subr.bf16.mxu0 0
    %133 = vmatpush1.bf16.msra.mxu0 0
    %134 = vmatprep.subr.bf16.mxu0 0
    %135 = vmatpush1.bf16.msra.mxu0 0
    %136 = vmatprep.subr.bf16.mxu0 0
    %137 = vmatpush1.bf16.msra.mxu0 0
    %138 = vmatprep.subr.bf16.mxu0 0
    %139 = vmatpush1.bf16.msra.mxu0 0
    %140 = vmatprep.subr.bf16.mxu0 0
    %141 = vmatpush1.bf16.msra.mxu0 0
    %142 = vmatprep.subr.bf16.mxu0 0
    %143 = vmatpush1.bf16.msra.mxu0 0
    %144 = vmatprep.subr.bf16.mxu0 0
    %145 = vmatpush1.bf16.msra.mxu0 0
    %146 = vmatprep.subr.bf16.mxu0 0
    %147 = vmatpush1.bf16.msra.mxu0 0
    %148 = vmatprep.subr.bf16.mxu0 0
    %149 = vmatpush1.bf16.msra.mxu0 0
    %150 = vmatprep.subr.bf16.mxu0 0
    %151 = vmatpush1.bf16.msra.mxu0 0
    %152 = vmatprep.subr.bf16.mxu0 0
    %153 = vmatpush1.bf16.msra.mxu0 0
    %154 = vmatprep.subr.bf16.mxu0 0
    %155 = vmatpush1.bf16.msra.mxu0 0
    %156 = vmatprep.subr.bf16.mxu0 0
    %157 = vmatpush1.bf16.msra.mxu0 0
    %158 = vmatprep.subr.bf16.mxu0 0
    %159 = vmatpush1.bf16.msra.mxu0 0
    %160 = vmatprep.subr.bf16.mxu0 0
    %161 = vmatpush1.bf16.msra.mxu0 0
    %162 = vmatprep.mubr.bf16.mxu0 0
    %163 = vmatmul.mubr.bf16.gmra.mrb[0].mxu0 %v81
    %v164 = vpop.f32.mrb[0].mxu0
    %v165 = vadd.f32 0.0, %v164
    %v166 = vpop.f32.mrb[0].mxu0
    %v167 = vpop.f32.mrb[0].mxu0
    %v168 = vpop.f32.mrb[0].mxu0
    %169 = vdwg.mxu0
    %v171 = vsel %vm83, %v77, 0
    %173 = vmatprep.subr.bf16.mxu0 0
    %174 = vmatpush1.bf16.msra.mxu0 %v171
    %175 = vmatprep.subr.bf16.mxu0 0
    %176 = vmatpush1.bf16.msra.mxu0 0
    %177 = vmatprep.subr.bf16.mxu0 0
    %178 = vmatpush1.bf16.msra.mxu0 0
    %179 = vmatprep.subr.bf16.mxu0 0
    %180 = vmatpush1.bf16.msra.mxu0 0
    %181 = vmatprep.subr.bf16.mxu0 0
    %182 = vmatpush1.bf16.msra.mxu0 0
    %183 = vmatprep.subr.bf16.mxu0 0
    %184 = vmatpush1.bf16.msra.mxu0 0
    %185 = vmatprep.subr.bf16.mxu0 0
    %186 = vmatpush1.bf16.msra.mxu0 0
    %187 = vmatprep.subr.bf16.mxu0 0
    %188 = vmatpush1.bf16.msra.mxu0 0
    %189 = vmatprep.subr.bf16.mxu0 0
    %190 = vmatpush1.bf16.msra.mxu0 0
    %191 = vmatprep.subr.bf16.mxu0 0
    %192 = vmatpush1.bf16.msra.mxu0 0
    %193 = vmatprep.subr.bf16.mxu0 0
    %194 = vmatpush1.bf16.msra.mxu0 0
    %195 = vmatprep.subr.bf16.mxu0 0
    %196 = vmatpush1.bf16.msra.mxu0 0
    %197 = vmatprep.subr.bf16.mxu0 0
    %198 = vmatpush1.bf16.msra.mxu0 0
    %199 = vmatprep.subr.bf16.mxu0 0
    %200 = vmatpush1.bf16.msra.mxu0 0
    %201 = vmatprep.subr.bf16.mxu0 0
    %202 = vmatpush1.bf16.msra.mxu0 0
    %203 = vmatprep.subr.bf16.mxu0 0
    %204 = vmatpush1.bf16.msra.mxu0 0
    %205 = vmatprep.mubr.bf16.mxu0 0
    %206 = vmatmul.mubr.bf16.gmra.mrb[0].mxu0 %v81
    %v207 = vpop.f32.mrb[0].mxu0
    %v208 = vadd.f32 0.0, %v207
    %v209 = vpop.f32.mrb[0].mxu0
    %v210 = vpop.f32.mrb[0].mxu0
    %v211 = vpop.f32.mrb[0].mxu0
    %212 = vdwg.mxu0
    %v213 = vmul.f32 %v122, %v122
    %v214 = vmul.f32 %v165, %v165
    %v215 = vadd.f32 %v213, %v214
    %v216 = vmul.f32 %v208, %v208
    %v217 = vadd.f32 %v215, %v216
    %v218 = vrsqrt.pop %v217
    %v219 = vmul.f32 %v217, %v218
    %vm220 = vcmp.eq.f32.partialorder %v217, inf
    %v221 = vsel %vm220, %v217, %v219
    %vm222 = vcmp.eq.f32.partialorder %v217, 0.0
    %v223 = vand.u32 %v217, 2147483648
    %v224 = vsel %vm222, %v223, %v221
    %v225 = vld [vmem:[%s4] sm:$0xf]
    %v226 = vld [vmem:[%s4 + $0x4] sm:$0xf]
    %v227 = vpack.c.bf16 %v224, %v224
    %v228 = vld [vmem:[%s5] sm:$0xf]
    %v229 = vld [vmem:[%s5 + $0x4] sm:$0xf]
    %v232 = vunpack.c.l.b16 %v228
    %v233 = vunpack.c.l.b16 %v229
    %v234 = vpack.c.b16 %v233, %v232
    %v239 = vunpack.c.l.b16 %v69
    %v240 = vunpack.c.l.b16 %v70
    %v241 = vunpack.c.l.b16 %v71
    %v242 = vunpack.c.l.b16 %v72
    %v243 = vpack.c.b16 %v240, %v239
    %v244 = vpack.c.b16 %v242, %v241
    %vm247 = vcmask 261120
    %v249 = vsel %vm247, %v234, 0
    %251 = vmatprep.subr.bf16.mxu0 0
    %252 = vmatpush1.bf16.msra.mxu0 %v243
    %253 = vmatprep.subr.bf16.mxu0 0
    %254 = vmatpush1.bf16.msra.mxu0 %v244
    %255 = vmatprep.subr.bf16.mxu0 0
    %256 = vmatpush1.bf16.msra.mxu0 0
    %257 = vmatprep.subr.bf16.mxu0 0
    %258 = vmatpush1.bf16.msra.mxu0 0
    %259 = vmatprep.subr.bf16.mxu0 0
    %260 = vmatpush1.bf16.msra.mxu0 0
    %261 = vmatprep.subr.bf16.mxu0 0
    %262 = vmatpush1.bf16.msra.mxu0 0
    %263 = vmatprep.subr.bf16.mxu0 0
    %264 = vmatpush1.bf16.msra.mxu0 0
    %265 = vmatprep.subr.bf16.mxu0 0
    %266 = vmatpush1.bf16.msra.mxu0 0
    %267 = vmatprep.subr.bf16.mxu0 0
    %268 = vmatpush1.bf16.msra.mxu0 0
    %269 = vmatprep.subr.bf16.mxu0 0
    %270 = vmatpush1.bf16.msra.mxu0 0
    %271 = vmatprep.subr.bf16.mxu0 0
    %272 = vmatpush1.bf16.msra.mxu0 0
    %273 = vmatprep.subr.bf16.mxu0 0
    %274 = vmatpush1.bf16.msra.mxu0 0
    %275 = vmatprep.subr.bf16.mxu0 0
    %276 = vmatpush1.bf16.msra.mxu0 0
    %277 = vmatprep.subr.bf16.mxu0 0
    %278 = vmatpush1.bf16.msra.mxu0 0
    %279 = vmatprep.subr.bf16.mxu0 0
    %280 = vmatpush1.bf16.msra.mxu0 0
    %281 = vmatprep.subr.bf16.mxu0 0
    %282 = vmatpush1.bf16.msra.mxu0 0
    %283 = vmatprep.mubr.bf16.mxu0 0
    %284 = vmatmul.mubr.bf16.gmra.mrb[0].mxu0 %v249
    %v285 = vpop.f32.mrb[0].mxu0
    %v286 = vadd.f32 0.0, %v285
    %v287 = vpop.f32.mrb[0].mxu0
    %v288 = vpop.f32.mrb[0].mxu0
    %v289 = vadd.f32 0.0, %v288
    %v290 = vpop.f32.mrb[0].mxu0
    %291 = vdwg.mxu0
    %v294 = vunpack.c.l.b16 %v225
    %v295 = vunpack.c.l.b16 %v226
    %v296 = vpack.c.b16 %v295, %v294
    %v298 = vsel %vm79, %v296, 0
    %v301 = vsel %vm83, %v227, 0
    %303 = vmatprep.subr.bf16.mxu0 0
    %304 = vmatpush1.bf16.msra.mxu0 %v301
    %305 = vmatprep.subr.bf16.mxu0 0
    %306 = vmatpush1.bf16.msra.mxu0 0
    %307 = vmatprep.subr.bf16.mxu0 0
    %308 = vmatpush1.bf16.msra.mxu0 0
    %309 = vmatprep.subr.bf16.mxu0 0
    %310 = vmatpush1.bf16.msra.mxu0 0
    %311 = vmatprep.subr.bf16.mxu0 0
    %312 = vmatpush1.bf16.msra.mxu0 0
    %313 = vmatprep.subr.bf16.mxu0 0
    %314 = vmatpush1.bf16.msra.mxu0 0
    %315 = vmatprep.subr.bf16.mxu0 0
    %316 = vmatpush1.bf16.msra.mxu0 0
    %317 = vmatprep.subr.bf16.mxu0 0
    %318 = vmatpush1.bf16.msra.mxu0 0
    %319 = vmatprep.subr.bf16.mxu0 0
    %320 = vmatpush1.bf16.msra.mxu0 0
    %321 = vmatprep.subr.bf16.mxu0 0
    %322 = vmatpush1.bf16.msra.mxu0 0
    %323 = vmatprep.subr.bf16.mxu0 0
    %324 = vmatpush1.bf16.msra.mxu0 0
    %325 = vmatprep.subr.bf16.mxu0 0
    %326 = vmatpush1.bf16.msra.mxu0 0
    %327 = vmatprep.subr.bf16.mxu0 0
    %328 = vmatpush1.bf16.msra.mxu0 0
    %329 = vmatprep.subr.bf16.mxu0 0
    %330 = vmatpush1.bf16.msra.mxu0 0
    %331 = vmatprep.subr.bf16.mxu0 0
    %332 = vmatpush1.bf16.msra.mxu0 0
    %333 = vmatprep.subr.bf16.mxu0 0
    %334 = vmatpush1.bf16.msra.mxu0 0
    %335 = vmatprep.mubr.bf16.mxu0 0
    %336 = vmatmul.mubr.bf16.gmra.mrb[0].mxu0 %v298
    %v337 = vpop.f32.mrb[0].mxu0
    %v338 = vadd.f32 %v286, %v337
    %v339 = vpop.f32.mrb[0].mxu0
    %v340 = vpop.f32.mrb[0].mxu0
    %v341 = vadd.f32 %v289, %v340
    %v342 = vpop.f32.mrb[0].mxu0
    %343 = vdwg.mxu0
    %v344 = vld [vmem:[%s3] sm:$0xf]
    %v345 = vpack.c.bf16 %v122, %v122
    %v347 = vsel %vm79, %v344, 0
    %v350 = vsel %vm83, %v345, 0
    %352 = vmatprep.subr.bf16.mxu0 0
    %353 = vmatpush1.bf16.msra.mxu0 %v350
    %354 = vmatprep.subr.bf16.mxu0 0
    %355 = vmatpush1.bf16.msra.mxu0 0
    %356 = vmatprep.subr.bf16.mxu0 0
    %357 = vmatpush1.bf16.msra.mxu0 0
    %358 = vmatprep.subr.bf16.mxu0 0
    %359 = vmatpush1.bf16.msra.mxu0 0
    %360 = vmatprep.subr.bf16.mxu0 0
    %361 = vmatpush1.bf16.msra.mxu0 0
    %362 = vmatprep.subr.bf16.mxu0 0
    %363 = vmatpush1.bf16.msra.mxu0 0
    %364 = vmatprep.subr.bf16.mxu0 0
    %365 = vmatpush1.bf16.msra.mxu0 0
    %366 = vmatprep.subr.bf16.mxu0 0
    %367 = vmatpush1.bf16.msra.mxu0 0
    %368 = vmatprep.subr.bf16.mxu0 0
    %369 = vmatpush1.bf16.msra.mxu0 0
    %370 = vmatprep.subr.bf16.mxu0 0
    %371 = vmatpush1.bf16.msra.mxu0 0
    %372 = vmatprep.subr.bf16.mxu0 0
    %373 = vmatpush1.bf16.msra.mxu0 0
    %374 = vmatprep.subr.bf16.mxu0 0
    %375 = vmatpush1.bf16.msra.mxu0 0
    %376 = vmatprep.subr.bf16.mxu0 0
    %377 = vmatpush1.bf16.msra.mxu0 0
    %378 = vmatprep.subr.bf16.mxu0 0
    %379 = vmatpush1.bf16.msra.mxu0 0
    %380 = vmatprep.subr.bf16.mxu0 0
    %381 = vmatpush1.bf16.msra.mxu0 0
    %382 = vmatprep.subr.bf16.mxu0 0
    %383 = vmatpush1.bf16.msra.mxu0 0
    %384 = vmatprep.mubr.bf16.mxu0 0
    %385 = vmatmul.mubr.bf16.gmra.mrb[0].mxu0 %v347
    %v386 = vpop.f32.mrb[0].mxu0
    %v387 = vadd.f32 0.0, %v386
    %v388 = vpop.f32.mrb[0].mxu0
    %v389 = vpop.f32.mrb[0].mxu0
    %v390 = vpop.f32.mrb[0].mxu0
    %391 = vdwg.mxu0
    %v392 = vpack.c.bf16 %v165, %v165
    %v394 = vsel %vm83, %v392, 0
    %396 = vmatprep.subr.bf16.mxu0 0
    %397 = vmatpush1.bf16.msra.mxu0 %v394
    %398 = vmatprep.subr.bf16.mxu0 0
    %399 = vmatpush1.bf16.msra.mxu0 0
    %400 = vmatprep.subr.bf16.mxu0 0
    %401 = vmatpush1.bf16.msra.mxu0 0
    %402 = vmatprep.subr.bf16.mxu0 0
    %403 = vmatpush1.bf16.msra.mxu0 0
    %404 = vmatprep.subr.bf16.mxu0 0
    %405 = vmatpush1.bf16.msra.mxu0 0
    %406 = vmatprep.subr.bf16.mxu0 0
    %407 = vmatpush1.bf16.msra.mxu0 0
    %408 = vmatprep.subr.bf16.mxu0 0
    %409 = vmatpush1.bf16.msra.mxu0 0
    %410 = vmatprep.subr.bf16.mxu0 0
    %411 = vmatpush1.bf16.msra.mxu0 0
    %412 = vmatprep.subr.bf16.mxu0 0
    %413 = vmatpush1.bf16.msra.mxu0 0
    %414 = vmatprep.subr.bf16.mxu0 0
    %415 = vmatpush1.bf16.msra.mxu0 0
    %416 = vmatprep.subr.bf16.mxu0 0
    %417 = vmatpush1.bf16.msra.mxu0 0
    %418 = vmatprep.subr.bf16.mxu0 0
    %419 = vmatpush1.bf16.msra.mxu0 0
    %420 = vmatprep.subr.bf16.mxu0 0
    %421 = vmatpush1.bf16.msra.mxu0 0
    %422 = vmatprep.subr.bf16.mxu0 0
    %423 = vmatpush1.bf16.msra.mxu0 0
    %424 = vmatprep.subr.bf16.mxu0 0
    %425 = vmatpush1.bf16.msra.mxu0 0
    %426 = vmatprep.subr.bf16.mxu0 0
    %427 = vmatpush1.bf16.msra.mxu0 0
    %428 = vmatprep.mubr.bf16.mxu0 0
    %429 = vmatmul.mubr.bf16.gmra.mrb[0].mxu0 %v347
    %v430 = vpop.f32.mrb[0].mxu0
    %v431 = vadd.f32 0.0, %v430
    %v432 = vpop.f32.mrb[0].mxu0
    %v433 = vpop.f32.mrb[0].mxu0
    %v434 = vpop.f32.mrb[0].mxu0
    %435 = vdwg.mxu0
    %v436 = vpack.c.bf16 %v208, %v208
    %v438 = vsel %vm83, %v436, 0
    %440 = vmatprep.subr.bf16.mxu0 0
    %441 = vmatpush1.bf16.msra.mxu0 %v438
    %442 = vmatprep.subr.bf16.mxu0 0
    %443 = vmatpush1.bf16.msra.mxu0 0
    %444 = vmatprep.subr.bf16.mxu0 0
    %445 = vmatpush1.bf16.msra.mxu0 0
    %446 = vmatprep.subr.bf16.mxu0 0
    %447 = vmatpush1.bf16.msra.mxu0 0
    %448 = vmatprep.subr.bf16.mxu0 0
    %449 = vmatpush1.bf16.msra.mxu0 0
    %450 = vmatprep.subr.bf16.mxu0 0
    %451 = vmatpush1.bf16.msra.mxu0 0
    %452 = vmatprep.subr.bf16.mxu0 0
    %453 = vmatpush1.bf16.msra.mxu0 0
    %454 = vmatprep.subr.bf16.mxu0 0
    %455 = vmatpush1.bf16.msra.mxu0 0
    %456 = vmatprep.subr.bf16.mxu0 0
    %457 = vmatpush1.bf16.msra.mxu0 0
    %458 = vmatprep.subr.bf16.mxu0 0
    %459 = vmatpush1.bf16.msra.mxu0 0
    %460 = vmatprep.subr.bf16.mxu0 0
    %461 = vmatpush1.bf16.msra.mxu0 0
    %462 = vmatprep.subr.bf16.mxu0 0
    %463 = vmatpush1.bf16.msra.mxu0 0
    %464 = vmatprep.subr.bf16.mxu0 0
    %465 = vmatpush1.bf16.msra.mxu0 0
    %466 = vmatprep.subr.bf16.mxu0 0
    %467 = vmatpush1.bf16.msra.mxu0 0
    %468 = vmatprep.subr.bf16.mxu0 0
    %469 = vmatpush1.bf16.msra.mxu0 0
    %470 = vmatprep.subr.bf16.mxu0 0
    %471 = vmatpush1.bf16.msra.mxu0 0
    %472 = vmatprep.mubr.bf16.mxu0 0
    %473 = vmatmul.mubr.bf16.gmra.mrb[0].mxu0 %v347
    %v474 = vpop.f32.mrb[0].mxu0
    %v475 = vadd.f32 0.0, %v474
    %v476 = vpop.f32.mrb[0].mxu0
    %v477 = vpop.f32.mrb[0].mxu0
    %v478 = vpop.f32.mrb[0].mxu0
    %479 = vdwg.mxu0
    %v480 = vld [vmem:[%s6] sm:$0xf]
    %v481 = vpack.c.bf16 %v341, %v338
    %v482 = vld [vmem:[%s7] sm:$0xff]
    %484 = vset.pattern.permute.xlu0 0
    %485 = vperm.xlu0 %484, %v482
    %v486 = vpop.permute.xlu0 %485
    %vm488 = vcmask 130048
    %v490 = vsel %vm488, %v480, 0
    %492 = vmatprep.subr.bf16.mxu0 0
    %493 = vmatpush1.bf16.msra.mxu0 %v481
    %494 = vmatprep.subr.bf16.mxu0 0
    %495 = vmatpush1.bf16.msra.mxu0 0
    %496 = vmatprep.subr.bf16.mxu0 0
    %497 = vmatpush1.bf16.msra.mxu0 0
    %498 = vmatprep.subr.bf16.mxu0 0
    %499 = vmatpush1.bf16.msra.mxu0 0
    %500 = vmatprep.subr.bf16.mxu0 0
    %501 = vmatpush1.bf16.msra.mxu0 0
    %502 = vmatprep.subr.bf16.mxu0 0
    %503 = vmatpush1.bf16.msra.mxu0 0
    %504 = vmatprep.subr.bf16.mxu0 0
    %505 = vmatpush1.bf16.msra.mxu0 0
    %506 = vmatprep.subr.bf16.mxu0 0
    %507 = vmatpush1.bf16.msra.mxu0 0
    %508 = vmatprep.subr.bf16.mxu0 0
    %509 = vmatpush1.bf16.msra.mxu0 0
    %510 = vmatprep.subr.bf16.mxu0 0
    %511 = vmatpush1.bf16.msra.mxu0 0
    %512 = vmatprep.subr.bf16.mxu0 0
    %513 = vmatpush1.bf16.msra.mxu0 0
    %514 = vmatprep.subr.bf16.mxu0 0
    %515 = vmatpush1.bf16.msra.mxu0 0
    %516 = vmatprep.subr.bf16.mxu0 0
    %517 = vmatpush1.bf16.msra.mxu0 0
    %518 = vmatprep.subr.bf16.mxu0 0
    %519 = vmatpush1.bf16.msra.mxu0 0
    %520 = vmatprep.subr.bf16.mxu0 0
    %521 = vmatpush1.bf16.msra.mxu0 0
    %522 = vmatprep.subr.bf16.mxu0 0
    %523 = vmatpush1.bf16.msra.mxu0 0
    %524 = vmatprep.mubr.bf16.mxu0 0
    %525 = vmatmul.mubr.bf16.gmra.mrb[0].mxu0 %v490
    %v526 = vpop.f32.mrb[0].mxu0
    %v527 = vadd.f32 %v486, %v526
    %v528 = vpop.f32.mrb[0].mxu0
    %v529 = vpop.f32.mrb[0].mxu0
    %v530 = vpop.f32.mrb[0].mxu0
    %531 = vdwg.mxu0
    %v532 = vxor.u32 %v527, 2147483648
    %v533 = vmul.f32 %v532, 1.442695
    %v534 = vpow.pop %v533
    %v535 = vadd.f32 %v534, 1.0
    %v536 = vrcp.pop %v535
    %v537 = vmul.f32 1.0, %v536
    %v538 = vmul.f32 %v387, %v537
    %v539 = vmul.f32 %v431, %v537
    %v540 = vmul.f32 %v475, %v537
    %v541 = vld [vmem:[%s8] sm:$0xf]
    %v542 = vpack.c.bf16 %v538, %v538
    %v544 = vsel %vm79, %v541, 0
    %v547 = vsel %vm83, %v542, 0
    %549 = vmatprep.subr.bf16.mxu0 0
    %550 = vmatpush1.bf16.msra.mxu0 %v547
    %551 = vmatprep.subr.bf16.mxu0 0
    %552 = vmatpush1.bf16.msra.mxu0 0
    %553 = vmatprep.subr.bf16.mxu0 0
    %554 = vmatpush1.bf16.msra.mxu0 0
    %555 = vmatprep.subr.bf16.mxu0 0
    %556 = vmatpush1.bf16.msra.mxu0 0
    %557 = vmatprep.subr.bf16.mxu0 0
    %558 = vmatpush1.bf16.msra.mxu0 0
    %559 = vmatprep.subr.bf16.mxu0 0
    %560 = vmatpush1.bf16.msra.mxu0 0
    %561 = vmatprep.subr.bf16.mxu0 0
    %562 = vmatpush1.bf16.msra.mxu0 0
    %563 = vmatprep.subr.bf16.mxu0 0
    %564 = vmatpush1.bf16.msra.mxu0 0
    %565 = vmatprep.subr.bf16.mxu0 0
    %566 = vmatpush1.bf16.msra.mxu0 0
    %567 = vmatprep.subr.bf16.mxu0 0
    %568 = vmatpush1.bf16.msra.mxu0 0
    %569 = vmatprep.subr.bf16.mxu0 0
    %570 = vmatpush1.bf16.msra.mxu0 0
    %571 = vmatprep.subr.bf16.mxu0 0
    %572 = vmatpush1.bf16.msra.mxu0 0
    %573 = vmatprep.subr.bf16.mxu0 0
    %574 = vmatpush1.bf16.msra.mxu0 0
    %575 = vmatprep.subr.bf16.mxu0 0
    %576 = vmatpush1.bf16.msra.mxu0 0
    %577 = vmatprep.subr.bf16.mxu0 0
    %578 = vmatpush1.bf16.msra.mxu0 0
    %579 = vmatprep.subr.bf16.mxu0 0
    %580 = vmatpush1.bf16.msra.mxu0 0
    %581 = vmatprep.mubr.bf16.mxu0 0
    %582 = vmatmul.mubr.bf16.gmra.mrb[0].mxu0 %v544
    %v583 = vpop.f32.mrb[0].mxu0
    %v584 = vadd.f32 0.0, %v583
    %v585 = vpop.f32.mrb[0].mxu0
    %v586 = vpop.f32.mrb[0].mxu0
    %v587 = vpop.f32.mrb[0].mxu0
    %588 = vdwg.mxu0
    %v589 = vpack.c.bf16 %v539, %v539
    %v591 = vsel %vm83, %v589, 0
    %593 = vmatprep.subr.bf16.mxu0 0
    %594 = vmatpush1.bf16.msra.mxu0 %v591
    %595 = vmatprep.subr.bf16.mxu0 0
    %596 = vmatpush1.bf16.msra.mxu0 0
    %597 = vmatprep.subr.bf16.mxu0 0
    %598 = vmatpush1.bf16.msra.mxu0 0
    %599 = vmatprep.subr.bf16.mxu0 0
    %600 = vmatpush1.bf16.msra.mxu0 0
    %601 = vmatprep.subr.bf16.mxu0 0
    %602 = vmatpush1.bf16.msra.mxu0 0
    %603 = vmatprep.subr.bf16.mxu0 0
    %604 = vmatpush1.bf16.msra.mxu0 0
    %605 = vmatprep.subr.bf16.mxu0 0
    %606 = vmatpush1.bf16.msra.mxu0 0
    %607 = vmatprep.subr.bf16.mxu0 0
    %608 = vmatpush1.bf16.msra.mxu0 0
    %609 = vmatprep.subr.bf16.mxu0 0
    %610 = vmatpush1.bf16.msra.mxu0 0
    %611 = vmatprep.subr.bf16.mxu0 0
    %612 = vmatpush1.bf16.msra.mxu0 0
    %613 = vmatprep.subr.bf16.mxu0 0
    %614 = vmatpush1.bf16.msra.mxu0 0
    %615 = vmatprep.subr.bf16.mxu0 0
    %616 = vmatpush1.bf16.msra.mxu0 0
    %617 = vmatprep.subr.bf16.mxu0 0
    %618 = vmatpush1.bf16.msra.mxu0 0
    %619 = vmatprep.subr.bf16.mxu0 0
    %620 = vmatpush1.bf16.msra.mxu0 0
    %621 = vmatprep.subr.bf16.mxu0 0
    %622 = vmatpush1.bf16.msra.mxu0 0
    %623 = vmatprep.subr.bf16.mxu0 0
    %624 = vmatpush1.bf16.msra.mxu0 0
    %625 = vmatprep.mubr.bf16.mxu0 0
    %626 = vmatmul.mubr.bf16.gmra.mrb[0].mxu0 %v544
    %v627 = vpop.f32.mrb[0].mxu0
    %v628 = vadd.f32 0.0, %v627
    %v629 = vpop.f32.mrb[0].mxu0
    %v630 = vpop.f32.mrb[0].mxu0
    %v631 = vpop.f32.mrb[0].mxu0
    %632 = vdwg.mxu0
    %v633 = vpack.c.bf16 %v540, %v540
    %v635 = vsel %vm83, %v633, 0
    %637 = vmatprep.subr.bf16.mxu0 0
    %638 = vmatpush1.bf16.msra.mxu0 %v635
    %639 = vmatprep.subr.bf16.mxu0 0
    %640 = vmatpush1.bf16.msra.mxu0 0
    %641 = vmatprep.subr.bf16.mxu0 0
    %642 = vmatpush1.bf16.msra.mxu0 0
    %643 = vmatprep.subr.bf16.mxu0 0
    %644 = vmatpush1.bf16.msra.mxu0 0
    %645 = vmatprep.subr.bf16.mxu0 0
    %646 = vmatpush1.bf16.msra.mxu0 0
    %647 = vmatprep.subr.bf16.mxu0 0
    %648 = vmatpush1.bf16.msra.mxu0 0
    %649 = vmatprep.subr.bf16.mxu0 0
    %650 = vmatpush1.bf16.msra.mxu0 0
    %651 = vmatprep.subr.bf16.mxu0 0
    %652 = vmatpush1.bf16.msra.mxu0 0
    %653 = vmatprep.subr.bf16.mxu0 0
    %654 = vmatpush1.bf16.msra.mxu0 0
    %655 = vmatprep.subr.bf16.mxu0 0
    %656 = vmatpush1.bf16.msra.mxu0 0
    %657 = vmatprep.subr.bf16.mxu0 0
    %658 = vmatpush1.bf16.msra.mxu0 0
    %659 = vmatprep.subr.bf16.mxu0 0
    %660 = vmatpush1.bf16.msra.mxu0 0
    %661 = vmatprep.subr.bf16.mxu0 0
    %662 = vmatpush1.bf16.msra.mxu0 0
    %663 = vmatprep.subr.bf16.mxu0 0
    %664 = vmatpush1.bf16.msra.mxu0 0
    %665 = vmatprep.subr.bf16.mxu0 0
    %666 = vmatpush1.bf16.msra.mxu0 0
    %667 = vmatprep.subr.bf16.mxu0 0
    %668 = vmatpush1.bf16.msra.mxu0 0
    %669 = vmatprep.mubr.bf16.mxu0 0
    %670 = vmatmul.mubr.bf16.gmra.mrb[0].mxu0 %v544
    %v671 = vpop.f32.mrb[0].mxu0
    %v672 = vadd.f32 0.0, %v671
    %v673 = vpop.f32.mrb[0].mxu0
    %v674 = vpop.f32.mrb[0].mxu0
    %v675 = vpop.f32.mrb[0].mxu0
    %676 = vdwg.mxu0
    %v677 = vmul.f32 %v538, %v584
    %v678 = vmul.f32 %v539, %v628
    %v679 = vadd.f32 %v677, %v678
    %v680 = vmul.f32 %v540, %v672
    %v681 = vadd.f32 %v679, %v680
    %v682 = vmul.f32 %v584, %v584
    %v683 = vmul.f32 %v628, %v628
    %v684 = vadd.f32 %v682, %v683
    %v685 = vmul.f32 %v672, %v672
    %v686 = vadd.f32 %v684, %v685
    %v687 = vadd.f32 %v686, 1e-06
    %v688 = vrcp.pop %v687
    %v689 = vmul.f32 %v687, %v688
    %v690 = vsub.f32 2.0, %v689
    %v691 = vmul.f32 %v688, %v690
    %vm692 = vcmp.ge.f32.partialorder %v681, 0.0
    %v693 = vmul.f32 %v681, 0.8
    %v694 = vmul.f32 %v693, %v691
    %v695 = vsel %vm692, 0.0, %v694
    %v696 = vmul.f32 %v695, %v584
    %v697 = vsub.f32 %v538, %v696
    %v698 = vmul.f32 %v695, %v628
    %v699 = vsub.f32 %v539, %v698
    %v700 = vmul.f32 %v695, %v672
    %v701 = vsub.f32 %v540, %v700
    %vm702 = vcmp.ge.f32.partialorder %v338, 0.0
    %vm703 = vcmp.ge.f32.partialorder %v341, 0.0
    %v704 = vmul.f32 %v338, 0.01
    %v705 = vmul.f32 %v341, 0.01
    %v706 = vsel %vm702, %v338, %v704
    %v707 = vsel %vm703, %v341, %v705
    %v708 = vld [vmem:[%s9] sm:$0xf]
    %v709 = vpack.c.bf16 %v697, %v697
    %v711 = vsel %vm79, %v708, 0
    %v714 = vsel %vm83, %v709, 0
    %716 = vmatprep.subr.bf16.mxu0 0
    %717 = vmatpush1.bf16.msra.mxu0 %v714
    %718 = vmatprep.subr.bf16.mxu0 0
    %719 = vmatpush1.bf16.msra.mxu0 0
    %720 = vmatprep.subr.bf16.mxu0 0
    %721 = vmatpush1.bf16.msra.mxu0 0
    %722 = vmatprep.subr.bf16.mxu0 0
    %723 = vmatpush1.bf16.msra.mxu0 0
    %724 = vmatprep.subr.bf16.mxu0 0
    %725 = vmatpush1.bf16.msra.mxu0 0
    %726 = vmatprep.subr.bf16.mxu0 0
    %727 = vmatpush1.bf16.msra.mxu0 0
    %728 = vmatprep.subr.bf16.mxu0 0
    %729 = vmatpush1.bf16.msra.mxu0 0
    %730 = vmatprep.subr.bf16.mxu0 0
    %731 = vmatpush1.bf16.msra.mxu0 0
    %732 = vmatprep.subr.bf16.mxu0 0
    %733 = vmatpush1.bf16.msra.mxu0 0
    %734 = vmatprep.subr.bf16.mxu0 0
    %735 = vmatpush1.bf16.msra.mxu0 0
    %736 = vmatprep.subr.bf16.mxu0 0
    %737 = vmatpush1.bf16.msra.mxu0 0
    %738 = vmatprep.subr.bf16.mxu0 0
    %739 = vmatpush1.bf16.msra.mxu0 0
    %740 = vmatprep.subr.bf16.mxu0 0
    %741 = vmatpush1.bf16.msra.mxu0 0
    %742 = vmatprep.subr.bf16.mxu0 0
    %743 = vmatpush1.bf16.msra.mxu0 0
    %744 = vmatprep.subr.bf16.mxu0 0
    %745 = vmatpush1.bf16.msra.mxu0 0
    %746 = vmatprep.subr.bf16.mxu0 0
    %747 = vmatpush1.bf16.msra.mxu0 0
    %748 = vmatprep.mubr.bf16.mxu0 0
    %749 = vmatmul.mubr.bf16.gmra.mrb[0].mxu0 %v711
    %v750 = vpop.f32.mrb[0].mxu0
    %v751 = vadd.f32 0.0, %v750
    %v752 = vpop.f32.mrb[0].mxu0
    %v753 = vpop.f32.mrb[0].mxu0
    %v754 = vpop.f32.mrb[0].mxu0
    %755 = vdwg.mxu0
    %v756 = vpack.c.bf16 %v699, %v699
    %v758 = vsel %vm83, %v756, 0
    %760 = vmatprep.subr.bf16.mxu0 0
    %761 = vmatpush1.bf16.msra.mxu0 %v758
    %762 = vmatprep.subr.bf16.mxu0 0
    %763 = vmatpush1.bf16.msra.mxu0 0
    %764 = vmatprep.subr.bf16.mxu0 0
    %765 = vmatpush1.bf16.msra.mxu0 0
    %766 = vmatprep.subr.bf16.mxu0 0
    %767 = vmatpush1.bf16.msra.mxu0 0
    %768 = vmatprep.subr.bf16.mxu0 0
    %769 = vmatpush1.bf16.msra.mxu0 0
    %770 = vmatprep.subr.bf16.mxu0 0
    %771 = vmatpush1.bf16.msra.mxu0 0
    %772 = vmatprep.subr.bf16.mxu0 0
    %773 = vmatpush1.bf16.msra.mxu0 0
    %774 = vmatprep.subr.bf16.mxu0 0
    %775 = vmatpush1.bf16.msra.mxu0 0
    %776 = vmatprep.subr.bf16.mxu0 0
    %777 = vmatpush1.bf16.msra.mxu0 0
    %778 = vmatprep.subr.bf16.mxu0 0
    %779 = vmatpush1.bf16.msra.mxu0 0
    %780 = vmatprep.subr.bf16.mxu0 0
    %781 = vmatpush1.bf16.msra.mxu0 0
    %782 = vmatprep.subr.bf16.mxu0 0
    %783 = vmatpush1.bf16.msra.mxu0 0
    %784 = vmatprep.subr.bf16.mxu0 0
    %785 = vmatpush1.bf16.msra.mxu0 0
    %786 = vmatprep.subr.bf16.mxu0 0
    %787 = vmatpush1.bf16.msra.mxu0 0
    %788 = vmatprep.subr.bf16.mxu0 0
    %789 = vmatpush1.bf16.msra.mxu0 0
    %790 = vmatprep.subr.bf16.mxu0 0
    %791 = vmatpush1.bf16.msra.mxu0 0
    %792 = vmatprep.mubr.bf16.mxu0 0
    %793 = vmatmul.mubr.bf16.gmra.mrb[0].mxu0 %v711
    %v794 = vpop.f32.mrb[0].mxu0
    %v795 = vadd.f32 0.0, %v794
    %v796 = vpop.f32.mrb[0].mxu0
    %v797 = vpop.f32.mrb[0].mxu0
    %v798 = vpop.f32.mrb[0].mxu0
    %799 = vdwg.mxu0
    %v800 = vpack.c.bf16 %v701, %v701
    %v802 = vsel %vm83, %v800, 0
    %804 = vmatprep.subr.bf16.mxu0 0
    %805 = vmatpush1.bf16.msra.mxu0 %v802
    %806 = vmatprep.subr.bf16.mxu0 0
    %807 = vmatpush1.bf16.msra.mxu0 0
    %808 = vmatprep.subr.bf16.mxu0 0
    %809 = vmatpush1.bf16.msra.mxu0 0
    %810 = vmatprep.subr.bf16.mxu0 0
    %811 = vmatpush1.bf16.msra.mxu0 0
    %812 = vmatprep.subr.bf16.mxu0 0
    %813 = vmatpush1.bf16.msra.mxu0 0
    %814 = vmatprep.subr.bf16.mxu0 0
    %815 = vmatpush1.bf16.msra.mxu0 0
    %816 = vmatprep.subr.bf16.mxu0 0
    %817 = vmatpush1.bf16.msra.mxu0 0
    %818 = vmatprep.subr.bf16.mxu0 0
    %819 = vmatpush1.bf16.msra.mxu0 0
    %820 = vmatprep.subr.bf16.mxu0 0
    %821 = vmatpush1.bf16.msra.mxu0 0
    %822 = vmatprep.subr.bf16.mxu0 0
    %823 = vmatpush1.bf16.msra.mxu0 0
    %824 = vmatprep.subr.bf16.mxu0 0
    %825 = vmatpush1.bf16.msra.mxu0 0
    %826 = vmatprep.subr.bf16.mxu0 0
    %827 = vmatpush1.bf16.msra.mxu0 0
    %828 = vmatprep.subr.bf16.mxu0 0
    %829 = vmatpush1.bf16.msra.mxu0 0
    %830 = vmatprep.subr.bf16.mxu0 0
    %831 = vmatpush1.bf16.msra.mxu0 0
    %832 = vmatprep.subr.bf16.mxu0 0
    %833 = vmatpush1.bf16.msra.mxu0 0
    %834 = vmatprep.subr.bf16.mxu0 0
    %835 = vmatpush1.bf16.msra.mxu0 0
    %836 = vmatprep.mubr.bf16.mxu0 0
    %837 = vmatmul.mubr.bf16.gmra.mrb[0].mxu0 %v711
    %v838 = vpop.f32.mrb[0].mxu0
    %v839 = vadd.f32 0.0, %v838
    %v840 = vpop.f32.mrb[0].mxu0
    %v841 = vpop.f32.mrb[0].mxu0
    %v842 = vpop.f32.mrb[0].mxu0
    %843 = vdwg.mxu0
    %v844 = vmul.f32 %v751, %v751
    %v845 = vmul.f32 %v795, %v795
    %v846 = vadd.f32 %v844, %v845
    %v847 = vmul.f32 %v839, %v839
    %v848 = vadd.f32 %v846, %v847
    %v849 = vrsqrt.pop %v848
    %v850 = vmul.f32 %v848, %v849
    %vm851 = vcmp.eq.f32.partialorder %v848, inf
    %v852 = vsel %vm851, %v848, %v850
    %vm853 = vcmp.eq.f32.partialorder %v848, 0.0
    %v854 = vand.u32 %v848, 2147483648
    %v855 = vsel %vm853, %v854, %v852
    %v856 = vld [vmem:[%s10] sm:$0x1]
    %v857 = vpack.c.bf16 %v855, %v855
    %v858 = vld [vmem:[%s11] sm:$0x1]
    %v859 = vpack.c.bf16 %v707, %v706
    %v861 = vsel %vm488, %v858, 0
    %863 = vmatprep.subr.bf16.mxu0 0
    %864 = vmatpush1.bf16.msra.mxu0 %v859
    %865 = vmatprep.subr.bf16.mxu0 0
    %866 = vmatpush1.bf16.msra.mxu0 0
    %867 = vmatprep.subr.bf16.mxu0 0
    %868 = vmatpush1.bf16.msra.mxu0 0
    %869 = vmatprep.subr.bf16.mxu0 0
    %870 = vmatpush1.bf16.msra.mxu0 0
    %871 = vmatprep.subr.bf16.mxu0 0
    %872 = vmatpush1.bf16.msra.mxu0 0
    %873 = vmatprep.subr.bf16.mxu0 0
    %874 = vmatpush1.bf16.msra.mxu0 0
    %875 = vmatprep.subr.bf16.mxu0 0
    %876 = vmatpush1.bf16.msra.mxu0 0
    %877 = vmatprep.subr.bf16.mxu0 0
    %878 = vmatpush1.bf16.msra.mxu0 0
    %879 = vmatprep.subr.bf16.mxu0 0
    %880 = vmatpush1.bf16.msra.mxu0 0
    %881 = vmatprep.subr.bf16.mxu0 0
    %882 = vmatpush1.bf16.msra.mxu0 0
    %883 = vmatprep.subr.bf16.mxu0 0
    %884 = vmatpush1.bf16.msra.mxu0 0
    %885 = vmatprep.subr.bf16.mxu0 0
    %886 = vmatpush1.bf16.msra.mxu0 0
    %887 = vmatprep.subr.bf16.mxu0 0
    %888 = vmatpush1.bf16.msra.mxu0 0
    %889 = vmatprep.subr.bf16.mxu0 0
    %890 = vmatpush1.bf16.msra.mxu0 0
    %891 = vmatprep.subr.bf16.mxu0 0
    %892 = vmatpush1.bf16.msra.mxu0 0
    %893 = vmatprep.subr.bf16.mxu0 0
    %894 = vmatpush1.bf16.msra.mxu0 0
    %895 = vmatprep.mubr.bf16.mxu0 0
    %896 = vmatmul.mubr.bf16.gmra.mrb[0].mxu0 %v861
    %v897 = vpop.f32.mrb[0].mxu0
    %v898 = vadd.f32 0.0, %v897
    %v899 = vpop.f32.mrb[0].mxu0
    %v900 = vpop.f32.mrb[0].mxu0
    %v901 = vpop.f32.mrb[0].mxu0
    %902 = vdwg.mxu0
    %v904 = vsel %vm79, %v856, 0
    %v907 = vsel %vm83, %v857, 0
    %909 = vmatprep.subr.bf16.mxu0 0
    %910 = vmatpush1.bf16.msra.mxu0 %v907
    %911 = vmatprep.subr.bf16.mxu0 0
    %912 = vmatpush1.bf16.msra.mxu0 0
    %913 = vmatprep.subr.bf16.mxu0 0
    %914 = vmatpush1.bf16.msra.mxu0 0
    %915 = vmatprep.subr.bf16.mxu0 0
    %916 = vmatpush1.bf16.msra.mxu0 0
    %917 = vmatprep.subr.bf16.mxu0 0
    %918 = vmatpush1.bf16.msra.mxu0 0
    %919 = vmatprep.subr.bf16.mxu0 0
    %920 = vmatpush1.bf16.msra.mxu0 0
    %921 = vmatprep.subr.bf16.mxu0 0
    %922 = vmatpush1.bf16.msra.mxu0 0
    %923 = vmatprep.subr.bf16.mxu0 0
    %924 = vmatpush1.bf16.msra.mxu0 0
    %925 = vmatprep.subr.bf16.mxu0 0
    %926 = vmatpush1.bf16.msra.mxu0 0
    %927 = vmatprep.subr.bf16.mxu0 0
    %928 = vmatpush1.bf16.msra.mxu0 0
    %929 = vmatprep.subr.bf16.mxu0 0
    %930 = vmatpush1.bf16.msra.mxu0 0
    %931 = vmatprep.subr.bf16.mxu0 0
    %932 = vmatpush1.bf16.msra.mxu0 0
    %933 = vmatprep.subr.bf16.mxu0 0
    %934 = vmatpush1.bf16.msra.mxu0 0
    %935 = vmatprep.subr.bf16.mxu0 0
    %936 = vmatpush1.bf16.msra.mxu0 0
    %937 = vmatprep.subr.bf16.mxu0 0
    %938 = vmatpush1.bf16.msra.mxu0 0
    %939 = vmatprep.subr.bf16.mxu0 0
    %940 = vmatpush1.bf16.msra.mxu0 0
    %941 = vmatprep.mubr.bf16.mxu0 0
    %942 = vmatmul.mubr.bf16.gmra.mrb[0].mxu0 %v904
    %v943 = vpop.f32.mrb[0].mxu0
    %v944 = vadd.f32 %v898, %v943
    %v945 = vpop.f32.mrb[0].mxu0
    %v946 = vpop.f32.mrb[0].mxu0
    %v947 = vpop.f32.mrb[0].mxu0
    %948 = vdwg.mxu0
    %949 = vst [vmem:[#allocation7] sm:$0x1] %v944
    // Predicated region
    $region58: #{tpu_custom_call.1} parent=1 // pred_check
      _
    $region59: #{tpu_custom_call.1} parent=1 // pred_check_branch
      %951 = sbr.rel (0) target = $region61
    $region60: #{tpu_custom_call.1} parent=1 // pred_region
      %s953 = ssub.s32 16, 16
      %954 = vsyncadd [#allocation4], %s953
      %s956 = sshll.u32 [#allocation7], 4
      %s957 = int_to_ptr.vmem [resolvable:$true] %s956
      %959 = dma.vmem_to_hbm [thread:$0]  %s957, 16, %s12, [#allocation4]
    $region61: #{tpu_custom_call.1} parent=1 // pred_fallthru
      _
    // Predicated region
    $region62: #{tpu_custom_call.1} parent=1 // pred_check
      _
    $region63: #{tpu_custom_call.1} parent=1 // pred_check_branch
      %961 = sbr.rel (0) target = $region65
    $region64: #{tpu_custom_call.1} parent=1 // pred_region
      %962 = dma.done [#allocation4], 16
    $region65: #{tpu_custom_call.1} parent=1 // pred_fallthru
      _
    %963 = vsyncpa [#allocation3], 1
    %964 = vsyncpa [#allocation6], 1
    %965 = vsyncpa [#allocation4], 1

</llo_original>
